<compile_context>
chip_gen: v7x
topology: tpu7x:2x2x1
jax: 0.10.0
libtpu: 0.0.40
codegen_flags: <defaults>
</compile_context>

<pallas_src>
import jax
import jax.numpy as jnp
from jax import lax
from jax.experimental import pallas as pl
from jax.experimental.pallas import tpu as pltpu

_LANES = 512            # lane-dense minor dim (multiple of 128)
_MAX_BLOCK_ROWS = 2048  # 2048 * 512 * 4B = 4 MiB per f32 input tile
                        # -> 2 inputs x 2 pipeline buffers x 4 MiB = 16 MiB VMEM


def _make_partial_kernel(rows: int, block_r: int):
    """Kernel accumulating element-wise partial sums of x*y and x+y."""
    need_mask = (rows % block_r) != 0   # only the last step can be partial

    def kernel(x_ref, y_ref, prod_ref, sum_ref):
        s = pl.program_id(0)

        @pl.when(s == 0)
        def _():
            prod_ref[...] = jnp.zeros_like(prod_ref)
            sum_ref[...] = jnp.zeros_like(sum_ref)

        x = x_ref[...].astype(jnp.float32)   # (block_r, LANES)
        y = y_ref[...].astype(jnp.float32)

        if need_mask:
            # Mask rows beyond the real row count (stale VMEM garbage) BEFORE
            # any arithmetic so it cannot corrupt the sums.
            row0 = s * block_r
            rid = row0 + lax.broadcasted_iota(jnp.int32, x.shape, 0)
            valid = rid < rows
            x = jnp.where(valid, x, 0.0)
            y = jnp.where(valid, y, 0.0)

        # Row reduction per step: vreg-aligned elementwise adds down to one
        # vreg group plus a tiny cross-sublane finish (XLU slot, ~free vs DMA).
        prod_ref[...] += jnp.sum(x * y, axis=0, keepdims=True)
        sum_ref[...] += jnp.sum(x + y, axis=0, keepdims=True)

    return kernel


def _bulk_partial_sums(xb, yb, rows: int, block_r: int, steps: int):
    """Run the streaming kernel over the (rows, LANES) slab; return scalars."""
    kernel = _make_partial_kernel(rows, block_r)

    in_spec = pl.BlockSpec((block_r, _LANES), lambda s: (s, 0))
    out_spec = pl.BlockSpec((1, _LANES), lambda s: (0, 0))   # resident accumulator

    prod_partial, sum_partial = pl.pallas_call(
        kernel,
        out_shape=(
            jax.ShapeDtypeStruct((1, _LANES), jnp.float32),
            jax.ShapeDtypeStruct((1, _LANES), jnp.float32),
        ),
        grid_spec=pltpu.PrefetchScalarGridSpec(
            num_scalar_prefetch=0,
            grid=(steps,),
            in_specs=[in_spec, in_spec],
            out_specs=[out_spec, out_spec],
        ),
        compiler_params=pltpu.CompilerParams(
            # Sequential reduction axis with VMEM-resident output accumulators.
            dimension_semantics=("arbitrary",),
            # 2 inputs x 2 buffers x <=4 MiB tiles + tiny accumulators; 48 MiB
            # leaves headroom and stays below v7x's 64 MiB physical VMEM.
            vmem_limit_bytes=48 * 1024 * 1024,
        ),
        cost_estimate=pl.CostEstimate(
            flops=3 * rows * _LANES,          # mul + two adds per element
            transcendentals=0,
            bytes_accessed=xb.nbytes + yb.nbytes + 2 * _LANES * 4,
        ),
    )(xb, yb)

    return jnp.sum(prod_partial), jnp.sum(sum_partial)


def dice_loss(inp, target, *, multiclass: bool = False, epsilon: float = 1e-6):
    """Pallas implementation of DiceLoss.forward (reduce_batch_first=True)."""
    if multiclass:
        # torch: input.flatten(0, 1)  — NCHW -> (N*C, H, W)
        assert inp.ndim == 4 and target.ndim == 4
        inp = inp.reshape((-1,) + inp.shape[2:])
        target = target.reshape((-1,) + target.shape[2:])

    assert inp.shape == target.shape
    assert inp.ndim == 3, "reduce_batch_first=True requires a 3-D tensor"

    # Contiguous flatten (no data-dependent reordering); the only wrapper-side
    # data movement left is whatever relayout XLA needs for this reshape.
    x1 = inp.reshape(-1)
    y1 = target.reshape(-1)
    total = x1.size

    rows = total // _LANES
    bulk = rows * _LANES
    rem = total - bulk                      # < _LANES elements

    prod_sum = jnp.float32(0.0)             # sum(x * y)
    set_sum = jnp.float32(0.0)              # sum(x) + sum(y) == sum(x + y)

    if rows > 0:
        # Full-dim block (always legal) for small inputs; capped streaming
        # block otherwise (multiple of 32 -> valid for f32/bf16/int8 packing).
        block_r = _MAX_BLOCK_ROWS if rows >= _MAX_BLOCK_ROWS else rows
        steps = -(-rows // block_r)
        xb = (x1 if rem == 0 else x1[:bulk]).reshape(rows, _LANES)
        yb = (y1 if rem == 0 else y1[:bulk]).reshape(rows, _LANES)
        p, s = _bulk_partial_sums(xb, yb, rows, block_r, steps)
        prod_sum = prod_sum + p
        set_sum = set_sum + s

    if rem > 0:
        # <512-element tail handled directly in JAX (negligible traffic).
        tx = x1[bulk:].astype(jnp.float32)
        ty = y1[bulk:].astype(jnp.float32)
        prod_sum = prod_sum + jnp.sum(tx * ty)
        set_sum = set_sum + jnp.sum(tx) + jnp.sum(ty)

    inter = 2.0 * prod_sum
    sets_sum = jnp.where(set_sum == 0.0, inter, set_sum)
    dice = (inter + epsilon) / (sets_sum + epsilon)
    return (1.0 - dice).astype(jnp.float32)


def _dice_loss_ref(inp, target, *, multiclass=False, epsilon=1e-6):
    if multiclass:
        inp = inp.reshape((-1,) + inp.shape[2:])
        target = target.reshape((-1,) + target.shape[2:])
    inter = 2.0 * jnp.sum(inp * target)
    sets_sum = jnp.sum(inp) + jnp.sum(target)
    sets_sum = jnp.where(sets_sum == 0, inter, sets_sum)
    return 1.0 - (inter + epsilon) / (sets_sum + epsilon)


if __name__ == "__main__":
    key = jax.random.PRNGKey(0)
    k1, k2, k3, k4 = jax.random.split(key, 4)

    # Binary case: (N, H, W) probabilities vs. {0,1} targets.
    x = jax.nn.sigmoid(jax.random.normal(k1, (2, 16, 16), dtype=jnp.float32))
    t = (jax.random.uniform(k2, (2, 16, 16)) > 0.5).astype(jnp.float32)
    loss = jax.block_until_ready(dice_loss(x, t, multiclass=False))
    ref = _dice_loss_ref(x, t, multiclass=False)
    assert jnp.allclose(loss, ref, atol=1e-5), (loss, ref)

    # Multiclass case: (N, C, H, W), flattened to (N*C, H, W) before the kernel.
    xm = jax.nn.softmax(jax.random.normal(k3, (2, 4, 16, 16), dtype=jnp.float32), axis=1)
    tm = jax.nn.one_hot(
        jax.random.randint(k4, (2, 16, 16), 0, 4), 4, axis=1, dtype=jnp.float32
    )
    loss_m = jax.block_until_ready(dice_loss(xm, tm, multiclass=True))
    ref_m = _dice_loss_ref(xm, tm, multiclass=True)
    assert jnp.allclose(loss_m, ref_m, atol=1e-5), (loss_m, ref_m)

    print("KERNEL_OK")
</pallas_src>

<mosaic_0001>
module attributes {stable_mosaic.version = 11 : i64} {
  func.func @kernel(%arg0: i32, %arg1: memref<1x512xf32, #tpu.memory_space<vmem>>, %arg2: memref<1x512xf32, #tpu.memory_space<vmem>>, %arg3: memref<1x512xf32, #tpu.memory_space<vmem>>, %arg4: memref<1x512xf32, #tpu.memory_space<vmem>>) attributes {dimension_semantics = [#tpu.dimension_semantics<arbitrary>], iteration_bounds = array<i64: 1>, scalar_prefetch = 0 : i64, scratch_operands = 0 : i64, tpu.core_type = #tpu.core_type<tc>, window_params = [{transform_indices = @transform_0, window_bounds = array<i64: 1, 512>}, {transform_indices = @transform_1, window_bounds = array<i64: 1, 512>}, {pipeline_mode = #tpu.pipeline_mode<synchronous>, transform_indices = @transform_2, window_bounds = array<i64: 1, 512>}, {pipeline_mode = #tpu.pipeline_mode<synchronous>, transform_indices = @transform_3, window_bounds = array<i64: 1, 512>}]} {
    %c0_i32 = arith.constant 0 : i32
    %0 = arith.cmpi eq, %arg0, %c0_i32 : i32
    %1 = arith.extui %0 : i1 to i32
    %c0_i32_0 = arith.constant 0 : i32
    %2 = arith.cmpi ne, %1, %c0_i32_0 : i32
    scf.if %2 {
      %cst_13 = arith.constant 0.000000e+00 : f32
      %17 = vector.broadcast %cst_13 : f32 to vector<1x512xf32>
      %c0_14 = arith.constant 0 : index
      %c0_15 = arith.constant 0 : index
      %18 = vector.load %arg3[%c0_14, %c0_15] : memref<1x512xf32, #tpu.memory_space<vmem>>, vector<1x512xf32>
      tpu.vector_store %arg3[%c0_14, %c0_15], %17 {strides = array<i32>} : memref<1x512xf32, #tpu.memory_space<vmem>>, vector<1x512xf32>,
      %cst_16 = arith.constant 0.000000e+00 : f32
      %19 = vector.broadcast %cst_16 : f32 to vector<1x512xf32>
      %c0_17 = arith.constant 0 : index
      %c0_18 = arith.constant 0 : index
      %20 = vector.load %arg4[%c0_17, %c0_18] : memref<1x512xf32, #tpu.memory_space<vmem>>, vector<1x512xf32>
      tpu.vector_store %arg4[%c0_17, %c0_18], %19 {strides = array<i32>} : memref<1x512xf32, #tpu.memory_space<vmem>>, vector<1x512xf32>,
    } else {
    }
    %c0 = arith.constant 0 : index
    %c0_1 = arith.constant 0 : index
    %3 = vector.load %arg1[%c0, %c0_1] : memref<1x512xf32, #tpu.memory_space<vmem>>, vector<1x512xf32>
    %c0_2 = arith.constant 0 : index
    %c0_3 = arith.constant 0 : index
    %4 = vector.load %arg2[%c0_2, %c0_3] : memref<1x512xf32, #tpu.memory_space<vmem>>, vector<1x512xf32>
    %c0_4 = arith.constant 0 : index
    %c0_5 = arith.constant 0 : index
    %5 = vector.load %arg3[%c0_4, %c0_5] : memref<1x512xf32, #tpu.memory_space<vmem>>, vector<1x512xf32>
    %6 = arith.mulf %3, %4 : vector<1x512xf32>
    %cst = arith.constant dense<0.000000e+00> : vector<512xf32>
    %7 = vector.multi_reduction <add>, %6, %cst [0] : vector<1x512xf32> to vector<512xf32>
    %8 = vector.shape_cast %7 : vector<512xf32> to vector<1x512xf32>
    %9 = arith.addf %5, %8 : vector<1x512xf32>
    %c0_6 = arith.constant 0 : index
    %c0_7 = arith.constant 0 : index
    %10 = vector.load %arg3[%c0_6, %c0_7] : memref<1x512xf32, #tpu.memory_space<vmem>>, vector<1x512xf32>
    tpu.vector_store %arg3[%c0_6, %c0_7], %9 {strides = array<i32>} : memref<1x512xf32, #tpu.memory_space<vmem>>, vector<1x512xf32>,
    %c0_8 = arith.constant 0 : index
    %c0_9 = arith.constant 0 : index
    %11 = vector.load %arg4[%c0_8, %c0_9] : memref<1x512xf32, #tpu.memory_space<vmem>>, vector<1x512xf32>
    %12 = arith.addf %3, %4 : vector<1x512xf32>
    %cst_10 = arith.constant dense<0.000000e+00> : vector<512xf32>
    %13 = vector.multi_reduction <add>, %12, %cst_10 [0] : vector<1x512xf32> to vector<512xf32>
    %14 = vector.shape_cast %13 : vector<512xf32> to vector<1x512xf32>
    %15 = arith.addf %11, %14 : vector<1x512xf32>
    %c0_11 = arith.constant 0 : index
    %c0_12 = arith.constant 0 : index
    %16 = vector.load %arg4[%c0_11, %c0_12] : memref<1x512xf32, #tpu.memory_space<vmem>>, vector<1x512xf32>
    tpu.vector_store %arg4[%c0_11, %c0_12], %15 {strides = array<i32>} : memref<1x512xf32, #tpu.memory_space<vmem>>, vector<1x512xf32>,
    return
  }
  func.func @transform_0(%arg0: i32) -> (i32, i32) {
    %c0_i32 = arith.constant 0 : i32
    %c0_i32_0 = arith.constant 0 : i32
    return %arg0, %c0_i32 : i32, i32
  }
  func.func @transform_1(%arg0: i32) -> (i32, i32) {
    %c0_i32 = arith.constant 0 : i32
    %c0_i32_0 = arith.constant 0 : i32
    return %arg0, %c0_i32 : i32, i32
  }
  func.func @transform_2(%arg0: i32) -> (i32, i32) {
    %c0_i32 = arith.constant 0 : i32
    %c0_i32_0 = arith.constant 0 : i32
    %c0_i32_1 = arith.constant 0 : i32
    return %c0_i32, %c0_i32_0 : i32, i32
  }
  func.func @transform_3(%arg0: i32) -> (i32, i32) {
    %c0_i32 = arith.constant 0 : i32
    %c0_i32_0 = arith.constant 0 : i32
    %c0_i32_1 = arith.constant 0 : i32
    return %c0_i32, %c0_i32_0 : i32, i32
  }
}

</mosaic_0001>

<llo_original>
// kernel: tpu_custom_call.1
$region0: #{tpu_custom_call.1}
  #allocation0 [shape = 'u32[]', space=smem, size = 0x4, offset = 0x4, fixed_abs, tag = 'smem constant byte address 0x4 - core index']
  #allocation1 [shape = 'u32[144,128]{1,0:T(1,128)}', space=vmem, size = 0x12000, scoped, tag = 'internal scratch']
  %s0 = inlined_call_operand.hbm [shape: f32[1,512], index: 0, kind: input, shape index: {}]
  %s1 = inlined_call_operand.hbm [shape: f32[1,512], index: 1, kind: input, shape index: {}]
  %s2 = inlined_call_operand.hbm [shape: f32[1,512], index: 2, kind: output, shape index: {0}]
  %s3 = inlined_call_operand.hbm [shape: f32[1,512], index: 3, kind: output, shape index: {1}]
  %4 = xla_tuple %s2, %s3
  %s5 = sld [smem:[#allocation0]]
  $region38: #{tpu_custom_call.1} parent=0
    _
  %s7 = ssub.s32 1, %s5
  %s8 = scalar_select 0, %s7, %s5
  $region1: #{tpu_custom_call.1} parent=0
    #allocation2 [shape = 'u8[2048]{0}', space=vmem, size = 0x800, scoped, tag = 'input window, operand 0, single buffered']
    #allocation3 [shape = 's32[1]{0}', space=sflag, size = 0x4, scoped, tag = 'scoped memory for tpu_custom_call.1']
    #allocation4 [shape = 's32[1]{0}', space=sflag, size = 0x4, scoped, tag = 'scoped memory for tpu_custom_call.1']
    #allocation5 [shape = 'u8[2048]{0}', space=vmem, size = 0x800, scoped, tag = 'input window, operand 1, single buffered']
    #allocation6 [shape = 's32[1]{0}', space=sflag, size = 0x4, scoped, tag = 'scoped memory for tpu_custom_call.1']
    #allocation7 [shape = 'u8[2048]{0}', space=vmem, size = 0x800, scoped, tag = 'output window, operand 0, single buffered']
    #allocation8 [shape = 'u8[2048]{0}', space=vmem, size = 0x800, scoped, tag = 'output window, operand 1, single buffered']
    #allocation9 [shape = 's32[1]{0}', space=sflag, size = 0x4, scoped, tag = 'scoped memory for tpu_custom_call.1']
    %9 = vsyncpa [#allocation3], 0
    %10 = vsyncpa [#allocation6], 0
    %11 = vsyncpa [#allocation4], 0
    %12 = vsyncpa [#allocation9], 0
    // Predicated region
    $region2: #{tpu_custom_call.1} parent=1 // pred_check
      _
    $region3: #{tpu_custom_call.1} parent=1 // pred_check_branch
      %14 = sbr.rel (0) target = $region5
    $region4: #{tpu_custom_call.1} parent=1 // pred_region
      %s16 = ssub.s32 64, 64
      %17 = vsyncadd [#allocation3], %s16
      %s19 = sshll.u32 [#allocation2], 4
      %s20 = int_to_ptr.vmem [resolvable:$true] %s19
      %22 = dma.hbm_to_vmem [thread:$0]  %s0, 64, %s20, [#allocation3]
    $region5: #{tpu_custom_call.1} parent=1 // pred_fallthru
      _
    // Predicated region
    $region6: #{tpu_custom_call.1} parent=1 // pred_check
      _
    $region7: #{tpu_custom_call.1} parent=1 // pred_check_branch
      %24 = sbr.rel (0) target = $region9
    $region8: #{tpu_custom_call.1} parent=1 // pred_region
      %s26 = ssub.s32 64, 64
      %27 = vsyncadd [#allocation6], %s26
      %s29 = sshll.u32 [#allocation5], 4
      %s30 = int_to_ptr.vmem [resolvable:$true] %s29
      %32 = dma.hbm_to_vmem [thread:$0]  %s1, 64, %s30, [#allocation6]
    $region9: #{tpu_custom_call.1} parent=1 // pred_fallthru
      _
    // Predicated region
    $region10: #{tpu_custom_call.1} parent=1 // pred_check
      _
    $region11: #{tpu_custom_call.1} parent=1 // pred_check_branch
      %34 = sbr.rel (0) target = $region13
    $region12: #{tpu_custom_call.1} parent=1 // pred_region
      %35 = dma.done [#allocation3], 64
    $region13: #{tpu_custom_call.1} parent=1 // pred_fallthru
      _
    // Predicated region
    $region14: #{tpu_custom_call.1} parent=1 // pred_check
      _
    $region15: #{tpu_custom_call.1} parent=1 // pred_check_branch
      %37 = sbr.rel (0) target = $region17
    $region16: #{tpu_custom_call.1} parent=1 // pred_region
      %38 = dma.done [#allocation6], 64
    $region17: #{tpu_custom_call.1} parent=1 // pred_fallthru
      _
    %p39 = scmp.eq.s32.totalorder 0, 0
    // Predicated region
    $region18: #{tpu_custom_call.1} parent=1 // pred_check
      %p40 = pneg %p39
    $region19: #{tpu_custom_call.1} parent=1 // pred_check_branch
      %42 = sbr.rel (%p40) target = $region21
    $region20: #{tpu_custom_call.1} parent=1 // pred_region
      %v43 = vlaneseq
      %vm44 = vcmp.ge.s32.totalorder %v43, 0
      %vm45 = vcmp.lt.s32.totalorder %v43, 512
      %vm46 = vmand %vm44, %vm45
      %47 = vst.msk [vmem:[#allocation7] sm:$0xf] %vm46, 0.0
      %48 = vst.msk [vmem:[#allocation8] sm:$0xf] %vm46, 0.0
    $region21: #{tpu_custom_call.1} parent=1 // pred_fallthru
      _
    %v49 = vld [vmem:[#allocation2] sm:$0xf]
    %v50 = vld [vmem:[#allocation5] sm:$0xf]
    %v51 = vld [vmem:[#allocation7] sm:$0xf]
    %v52 = vmul.f32 %v49, %v50
    %v53 = vadd.f32 %v52, 0.0
    %v54 = vadd.f32 %v51, %v53
    %v55 = vlaneseq
    %vm56 = vcmp.ge.s32.totalorder %v55, 0
    %vm57 = vcmp.lt.s32.totalorder %v55, 512
    %vm58 = vmand %vm56, %vm57
    %59 = vst.msk [vmem:[#allocation7] sm:$0xf] %vm58, %v54
    %v60 = vld [vmem:[#allocation8] sm:$0xf]
    %v61 = vadd.f32 %v49, %v50
    %v62 = vadd.f32 %v61, 0.0
    %v63 = vadd.f32 %v60, %v62
    %64 = vst.msk [vmem:[#allocation8] sm:$0xf] %vm58, %v63
    // Predicated region
    $region22: #{tpu_custom_call.1} parent=1 // pred_check
      _
    $region23: #{tpu_custom_call.1} parent=1 // pred_check_branch
      %66 = sbr.rel (0) target = $region25
    $region24: #{tpu_custom_call.1} parent=1 // pred_region
      %s68 = ssub.s32 64, 64
      %69 = vsyncadd [#allocation4], %s68
      %s71 = sshll.u32 [#allocation7], 4
      %s72 = int_to_ptr.vmem [resolvable:$true] %s71
      %74 = dma.vmem_to_hbm [thread:$0]  %s72, 64, %s2, [#allocation4]
    $region25: #{tpu_custom_call.1} parent=1 // pred_fallthru
      _
    // Predicated region
    $region26: #{tpu_custom_call.1} parent=1 // pred_check
      _
    $region27: #{tpu_custom_call.1} parent=1 // pred_check_branch
      %76 = sbr.rel (0) target = $region29
    $region28: #{tpu_custom_call.1} parent=1 // pred_region
      %s78 = ssub.s32 64, 64
      %79 = vsyncadd [#allocation9], %s78
      %s81 = sshll.u32 [#allocation8], 4
      %s82 = int_to_ptr.vmem [resolvable:$true] %s81
      %84 = dma.vmem_to_hbm [thread:$0]  %s82, 64, %s3, [#allocation9]
    $region29: #{tpu_custom_call.1} parent=1 // pred_fallthru
      _
    // Predicated region
    $region30: #{tpu_custom_call.1} parent=1 // pred_check
      _
    $region31: #{tpu_custom_call.1} parent=1 // pred_check_branch
      %86 = sbr.rel (0) target = $region33
    $region32: #{tpu_custom_call.1} parent=1 // pred_region
      %87 = dma.done [#allocation4], 64
    $region33: #{tpu_custom_call.1} parent=1 // pred_fallthru
      _
    // Predicated region
    $region34: #{tpu_custom_call.1} parent=1 // pred_check
      _
    $region35: #{tpu_custom_call.1} parent=1 // pred_check_branch
      %89 = sbr.rel (0) target = $region37
    $region36: #{tpu_custom_call.1} parent=1 // pred_region
      %90 = dma.done [#allocation9], 64
    $region37: #{tpu_custom_call.1} parent=1 // pred_fallthru
      _
    %91 = vsyncpa [#allocation3], 1
    %92 = vsyncpa [#allocation6], 1
    %93 = vsyncpa [#allocation4], 1
    %94 = vsyncpa [#allocation9], 1

</llo_original>
